<compile_context>
chip_gen: v5e
topology: v5e:2x2
jax: 0.10.0
libtpu: 0.0.40
codegen_flags: <defaults>
</compile_context>

<pallas_src>
import functools

import numpy as np
import jax
import jax.numpy as jnp
from jax.experimental import pallas as pl
from jax.experimental.pallas import tpu as pltpu


# ------------------------------ in-kernel helpers ------------------------------
def _masked_softmax(scores, valid):
    """Softmax over the last axis; rows with no valid entry get all-zero weights."""
    f32 = jnp.float32
    neg = jnp.float32(-1e30)
    sm = jnp.where(valid, scores, neg)
    m = jnp.max(sm, axis=-1, keepdims=True)
    p = jnp.exp(sm - m) * valid.astype(f32)
    denom = jnp.sum(p, axis=-1, keepdims=True)
    has_edge = denom > 0.0
    den = jnp.where(has_edge, denom, 1.0)
    inv = pl.reciprocal(den, approx=True)          # EUP slot
    inv = inv * (2.0 - den * inv)                  # one Newton step -> ~f32 accuracy
    return jnp.where(has_edge, p * inv, 0.0)


def _pack_graph_rows(y, out_pack):
    """[B_blk, GPG, D] -> [B_blk*GPG//out_pack, out_pack*D] lane-dense rows.

    Within a grid block, output row r / lane slot p holds graph p*rows + r (rows = Bt//out_pack);
    the wrapper undoes this with a tiny transpose.  Uses only leading-dim reshape, contiguous
    sublane slices and a lane concat.
    """
    b_blk, gpg, d = y.shape
    y2 = y.reshape(b_blk * gpg, d)
    if out_pack == 1:
        return y2
    rows = (b_blk * gpg) // out_pack
    parts = [y2[p * rows:(p + 1) * rows, :] for p in range(out_pack)]
    return jnp.concatenate(parts, axis=-1)


# ----------------------------------- kernels -----------------------------------
def _gnn_pool_kernel(x_ref, e_ref, wcat_ref, bcat_ref, pool_ref, out_ref, *,
                     D, inv_sqrt_d, out_pack, use_bf16):
    f32 = jnp.float32
    mx = (lambda a: a.astype(jnp.bfloat16)) if use_bf16 else (lambda a: a)
    B_blk, Npack, _ = e_ref.shape

    # Fused projection: one MXU matmul -> [h3 | h4+w5b | h1 | h2 | c1] per node.
    h = jnp.dot(x_ref[...], wcat_ref[...], preferred_element_type=f32) + bcat_ref[...]
    h = h.reshape(B_blk, Npack, h.shape[-1])
    h3 = h[..., 0 * D:1 * D]
    h4 = h[..., 1 * D:2 * D]          # already includes + w5_bias (folded into b4)
    h1 = h[..., 2 * D:3 * D]
    h2 = h[..., 3 * D:4 * D]
    c1 = h[..., 4 * D:4 * D + 1]      # h3 . w5_weight (folded into the projection)

    e = e_ref[...]                    # [B_blk, Npack, Npack] block-diag, target-major distances
    valid = e > 0.0                   # zero entries = masked / cross-graph / no edge

    # scores[b, i, j] = (h3_i . h4_j + e_ij * c1_i) / sqrt(D)  on 128x128 block-diag MXU tiles.
    scores = jnp.einsum('bid,bjd->bij', mx(h3), mx(h4), preferred_element_type=f32)
    scores = (scores + e * c1) * inv_sqrt_d
    alpha = _masked_softmax(scores, valid)

    # Mean pool folded into the aggregation: pooled_g = (1/N) sum_{k in g}(h1_k + colsum_k*h2_k)
    colsum = jnp.sum(alpha, axis=1)                       # [B_blk, Npack] (sum over targets)
    node_mix = h1 + colsum[:, :, None] * h2               # [B_blk, Npack, D]
    pool = jnp.broadcast_to(pool_ref[...][None], (B_blk,) + pool_ref.shape)
    pooled = jnp.einsum('bgJ,bJd->bgd', pool, node_mix,
                        preferred_element_type=f32)        # [B_blk, GPG, D]
    out_ref[...] = _pack_graph_rows(pooled, out_pack).astype(out_ref.dtype)


def _gnn_select_kernel(x_ref, esel_ref, sel_ref, wcat_ref, bcat_ref, out_ref, *,
                       D, inv_sqrt_d, out_pack, use_bf16):
    f32 = jnp.float32
    mx = (lambda a: a.astype(jnp.bfloat16)) if use_bf16 else (lambda a: a)
    B_blk, GPG, Npack = sel_ref.shape

    h = jnp.dot(x_ref[...], wcat_ref[...], preferred_element_type=f32) + bcat_ref[...]
    h = h.reshape(B_blk, Npack, h.shape[-1])
    h4 = h[..., 1 * D:2 * D]
    h2 = h[..., 3 * D:4 * D]

    # Select the agent (target) row of every graph BEFORE scoring -> only 1/N of the attention
    # work, and the score tile stays lane-dense ([GPG, 128]).
    sel = sel_ref[...]                                    # block-structured one-hot [B_blk,GPG,128]
    hsel = jnp.einsum('bgJ,bJc->bgc', sel, h, preferred_element_type=f32)
    h3s = hsel[..., 0 * D:1 * D]
    h1s = hsel[..., 2 * D:3 * D]
    c1s = hsel[..., 4 * D:4 * D + 1]

    esel = esel_ref[...]                                  # agent row of the masked adjacency
    valid = esel > 0.0
    scores = jnp.einsum('bgd,bJd->bgJ', mx(h3s), mx(h4), preferred_element_type=f32)
    scores = (scores + esel * c1s) * inv_sqrt_d
    alpha = _masked_softmax(scores, valid)

    aggr = jnp.einsum('bgJ,bJd->bgd', mx(alpha), mx(h2), preferred_element_type=f32)
    out_ref[...] = _pack_graph_rows(h1s + aggr, out_pack).astype(out_ref.dtype)


# ----------------------------------- wrapper -----------------------------------
def gnn_forward(node_obs, adj, params, *, sensing_radius, n_agents,
                mask_agent_to_other, aggregate, agent_ids=None,
                block_graphs=256, use_bf16=False):
    f32 = jnp.float32
    node_obs = jnp.asarray(node_obs, f32)
    adj = jnp.asarray(adj, f32)
    B, N, F = node_obs.shape
    D = params['w1'].shape[1]

    # Graphs per 128-lane group (block-diagonal attention packing); falls back to 1 for odd N.
    GPG = 128 // N if (N <= 128 and 128 % N == 0) else 1
    Npack = GPG * N

    # Batch block: multiple of GPG and of the sublane tile; keep >=2 grid steps when possible
    # so both v7x TensorCores get work along the "parallel" batch axis.
    align = max(GPG, 16 if use_bf16 else 8)
    Bt = max(1, min(int(block_graphs), int(B)))
    Bt = ((Bt + align - 1) // align) * align
    while Bt > align and -(-B // Bt) < 2:
        Bt = max(align, ((Bt // 2 + align - 1) // align) * align)
    nsteps = -(-B // Bt)
    Bpad = nsteps * Bt
    pad = Bpad - B
    B_blk = Bt // GPG

    # Lane-dense output: out_pack graphs share one (out_pack*D)-lane output row.
    out_pack = 1
    for p in (4, 2):
        if Bt % p == 0 and (Bpad == Bt or (Bt // p) % 8 == 0):
            out_pack = p
            break

    # ---- node features, flat [Bpad*N, F] so the fused projection is one dense matmul ----
    x_flat = node_obs.reshape(B * N, F)
    if pad:
        x_flat = jnp.concatenate([x_flat, jnp.zeros((pad * N, F), f32)], axis=0)

    # ---- fused projection weights: columns [W3 | W4 | W1 | W2 | W3@w5w | zero pad] ----
    w1, w2, w3, w4 = (jnp.asarray(params[k], f32) for k in ('w1', 'w2', 'w3', 'w4'))
    b1, b2, b3, b4 = (jnp.asarray(params[k], f32) for k in ('b1', 'b2', 'b3', 'b4'))
    w5w = jnp.asarray(params['w5w'], f32)                 # [1, D]
    w5b = jnp.asarray(params['w5b'], f32)                 # [1, D]
    padw = (-(4 * D + 1)) % 8
    c1w = (w3 @ w5w[0])[:, None]                          # [F, 1]
    c1b = jnp.sum(b3 * w5w, axis=1, keepdims=True)        # [1, 1]
    wcat = jnp.concatenate([w3, w4, w1, w2, c1w, jnp.zeros((F, padw), f32)], axis=1)
    bcat = jnp.concatenate([b3, b4 + w5b, b1, b2, c1b, jnp.zeros((1, padw), f32)], axis=1)
    Wtot = 4 * D + 1 + padw
    if use_bf16:                                          # v6e/v7x MXU fast path
        x_flat = x_flat.astype(jnp.bfloat16)
        wcat = wcat.astype(jnp.bfloat16)

    # ---- masked, target-major adjacency (all masking done once, in the wrapper) ----
    if pad:
        adj = jnp.concatenate([adj, jnp.zeros((pad, N, N), f32)], axis=0)
    adjT = jnp.swapaxes(adj, 1, 2)                        # [Bpad, tgt, src]
    valid = jnp.logical_and(adjT > 0.0, adjT < jnp.float32(sensing_radius))
    if mask_agent_to_other:
        allowT = np.ones((N, N), np.float32)
        allowT[n_agents:, :n_agents] = 0.0                # drop src(agent) -> tgt(non-agent)
        valid = jnp.logical_and(valid, jnp.asarray(allowT)[None] > 0.0)
    adjT_m = jnp.where(valid, adjT, 0.0)                  # strictly > 0 exactly on kept edges

    eye = jnp.eye(GPG, dtype=f32)
    grid = (nsteps,)
    inv_sqrt_d = float(1.0 / np.sqrt(float(D)))

    def rep(shape):
        return pl.BlockSpec(shape, lambda g: (0,) * len(shape))

    x_spec = pl.BlockSpec((Bt * N, F), lambda g: (g, 0))
    out_spec = pl.BlockSpec((Bt // out_pack, out_pack * D), lambda g: (g, 0))
    out_shape = jax.ShapeDtypeStruct((Bpad // out_pack, out_pack * D), f32)

    # Explicit VMEM budget: v7x only has 64 MiB physical, v5e's scoped default is 16 MiB.
    in_bytes = Bt * N * F * (2 if use_bf16 else 4)
    att_rows = Npack if aggregate else GPG
    in_bytes += (1 if aggregate else 2) * B_blk * att_rows * Npack * 4
    tmp_bytes = 6 * B_blk * att_rows * Npack * 4
    tmp_bytes += Bt * N * (-(-Wtot // 128) * 128) * 4
    est = 2 * in_bytes + tmp_bytes + (2 << 20)
    vmem_limit = int(min(max(2 * est, 32 * 1024 * 1024), 56 * 1024 * 1024))
    cparams = pltpu.CompilerParams(dimension_semantics=("parallel",),
                                   vmem_limit_bytes=vmem_limit)

    def unpack(out2):
        if out_pack == 1:
            return out2[:B]
        res = out2.reshape(nsteps, Bt // out_pack, out_pack, D)
        res = jnp.transpose(res, (0, 2, 1, 3)).reshape(Bpad, D)
        return res[:B]

    if aggregate:
        # Block-diagonal, target-major edge tensor: [Bpad/GPG, GPG*N, GPG*N].
        adjT_g = adjT_m.reshape(Bpad // GPG, GPG, N, N)
        e_blk = jnp.einsum('bgij,gh->bgihj', adjT_g, eye).reshape(Bpad // GPG, Npack, Npack)
        pool_mat = jnp.asarray(
            np.kron(np.eye(GPG, dtype=np.float32), np.ones((1, N), np.float32))
            / np.float32(N))                              # [GPG, Npack] segmented mean-pool
        kern = functools.partial(_gnn_pool_kernel, D=D, inv_sqrt_d=inv_sqrt_d,
                                 out_pack=out_pack, use_bf16=use_bf16)
        out2 = pl.pallas_call(
            kern, grid=grid,
            in_specs=[x_spec,
                      pl.BlockSpec((B_blk, Npack, Npack), lambda g: (g, 0, 0)),
                      rep((F, Wtot)), rep((1, Wtot)), rep((GPG, Npack))],
            out_specs=out_spec, out_shape=out_shape,
            compiler_params=cparams,
        )(x_flat, e_blk, wcat, bcat, pool_mat)
        return unpack(out2)

    assert agent_ids is not None, "agent_ids is required when aggregate=False"
    aid = jnp.asarray(agent_ids).reshape(-1).astype(jnp.int32)
    if pad:
        aid = jnp.concatenate([aid, jnp.zeros((pad,), jnp.int32)], axis=0)
    sel = jax.nn.one_hot(aid, N, dtype=f32)               # one-hot over target nodes, [Bpad, N]
    e_row = jnp.einsum('bi,bij->bj', sel, adjT_m)         # agent (target) row of masked adjacency
    e_sel = jnp.einsum('bgj,gh->bghj', e_row.reshape(Bpad // GPG, GPG, N),
                       eye).reshape(Bpad // GPG, GPG, Npack)
    sel_blk = jnp.einsum('bgj,gh->bghj', sel.reshape(Bpad // GPG, GPG, N),
                         eye).reshape(Bpad // GPG, GPG, Npack)
    kern = functools.partial(_gnn_select_kernel, D=D, inv_sqrt_d=inv_sqrt_d,
                             out_pack=out_pack, use_bf16=use_bf16)
    out2 = pl.pallas_call(
        kern, grid=grid,
        in_specs=[x_spec,
                  pl.BlockSpec((B_blk, GPG, Npack), lambda g: (g, 0, 0)),
                  pl.BlockSpec((B_blk, GPG, Npack), lambda g: (g, 0, 0)),
                  rep((F, Wtot)), rep((1, Wtot))],
        out_specs=out_spec, out_shape=out_shape,
        compiler_params=cparams,
    )(x_flat, e_sel, sel_blk, wcat, bcat)
    return unpack(out2)


# ------------------------- pure numpy reference (sparse, PyG-style) -------------------------
def reference_gnn(node_obs, adj, params, *, sensing_radius, n_agents,
                  mask_agent_to_other, aggregate, agent_ids=None):
    node_obs = np.asarray(node_obs, np.float32)
    adj = np.asarray(adj, np.float32)
    W = {k: np.asarray(v, np.float32) for k, v in params.items()}
    b1, b2, b3, b4 = W['b1'][0], W['b2'][0], W['b3'][0], W['b4'][0]
    w5w, w5b = W['w5w'][0], W['w5b'][0]
    B, N, F = node_obs.shape
    D = W['w1'].shape[1]

    node_outs, pooled = [], []
    for bi in range(B):
        A = adj[bi].copy()
        x = node_obs[bi]
        mask = ((A < sensing_radius) & (A > 0)).astype(np.float32)
        Am = mask * A
        if mask_agent_to_other:
            Am[:n_agents, n_agents:] = 0.0
        src, tgt = np.nonzero(Am)               # edge src -> tgt, attr = Am[src, tgt]
        eattr = Am[src, tgt]

        h1 = x @ W['w1'] + b1
        h2 = x @ W['w2'] + b2
        h3 = x @ W['w3'] + b3
        h4 = x @ W['w4'] + b4

        e_t = eattr[:, None] * w5w[None, :] + w5b[None, :]          # [E, D]
        scores = np.sum(h3[tgt] * (h4[src] + e_t), axis=-1) / np.sqrt(np.float32(D))

        aggr = np.zeros((N, D), dtype=np.float32)
        for i in range(N):
            selm = tgt == i
            if not np.any(selm):
                continue
            s = scores[selm]
            ex = np.exp(s - s.max())
            a = ex / ex.sum()
            aggr[i] = (a[:, None] * h2[src[selm]]).sum(axis=0)
        out = h1 + aggr
        node_outs.append(out)
        pooled.append(out.mean(axis=0))

    if aggregate:
        return np.stack(pooled)
    aid = np.asarray(agent_ids).squeeze()
    return np.stack(node_outs)[np.arange(B), aid, :]


if __name__ == "__main__":
    # batch of graphs, nodes/graph, in_features, out_features
    B, N, F, D = 6, 8, 16, 32
    n_agents = 3
    sensing_radius = 1.0
    mask_agent_to_other = True

    key = jax.random.PRNGKey(0)
    ks = jax.random.split(key, 13)

    node_obs = jax.random.normal(ks[0], (B, N, F), jnp.float32)
    dists = jax.random.uniform(ks[1], (B, N, N), jnp.float32, minval=0.0, maxval=2.0)
    adj = dists * (1.0 - jnp.eye(N, dtype=jnp.float32))[None]      # zero self-distance

    def lin_init(kw, kb, fan_in, fan_out):
        bound = 1.0 / np.sqrt(fan_in)
        w = jax.random.uniform(kw, (fan_out, fan_in), jnp.float32, minval=-bound, maxval=bound)
        b = jax.random.uniform(kb, (fan_out,), jnp.float32, minval=-bound, maxval=bound)
        return jnp.transpose(w), b[None, :]        # [F, D], [1, D]

    params = {}
    params['w1'], params['b1'] = lin_init(ks[2], ks[3], F, D)
    params['w2'], params['b2'] = lin_init(ks[4], ks[5], F, D)
    params['w3'], params['b3'] = lin_init(ks[6], ks[7], F, D)
    params['w4'], params['b4'] = lin_init(ks[8], ks[9], F, D)
    params['w5w'], params['w5b'] = lin_init(ks[10], ks[11], 1, D)   # w5: Linear(1, D)

    agent_ids = jax.random.randint(ks[12], (B, 1), 0, n_agents, jnp.int32)

    common = dict(sensing_radius=sensing_radius, n_agents=n_agents,
                  mask_agent_to_other=mask_agent_to_other)

    # ---- small batch (single grid step, padded to one 16-graph group) ----
    out_pool = jax.block_until_ready(
        gnn_forward(node_obs, adj, params, aggregate=True, **common))
    ref_pool = reference_gnn(node_obs, adj, params, aggregate=True, **common)
    np.testing.assert_allclose(np.asarray(out_pool), ref_pool, rtol=1e-4, atol=1e-4)

    out_sel = jax.block_until_ready(
        gnn_forward(node_obs, adj, params, aggregate=False, agent_ids=agent_ids, **common))
    ref_sel = reference_gnn(node_obs, adj, params, aggregate=False, agent_ids=agent_ids, **common)
    np.testing.assert_allclose(np.asarray(out_sel), ref_sel, rtol=1e-4, atol=1e-4)

    # ---- larger batch: exercises multi-step grid, padded tail and the output-pack fallback ----
    B2 = 40
    k2 = jax.random.split(jax.random.PRNGKey(1), 3)
    node_obs2 = jax.random.normal(k2[0], (B2, N, F), jnp.float32)
    adj2 = jax.random.uniform(k2[1], (B2, N, N), jnp.float32, minval=0.0, maxval=2.0) \
        * (1.0 - jnp.eye(N, dtype=jnp.float32))[None]
    agent_ids2 = jax.random.randint(k2[2], (B2, 1), 0, n_agents, jnp.int32)

    out2p = jax.block_until_ready(
        gnn_forward(node_obs2, adj2, params, aggregate=True, block_graphs=16, **common))
    ref2p = reference_gnn(node_obs2, adj2, params, aggregate=True, **common)
    np.testing.assert_allclose(np.asarray(out2p), ref2p, rtol=1e-4, atol=1e-4)

    out2s = jax.block_until_ready(
        gnn_forward(node_obs2, adj2, params, aggregate=False, agent_ids=agent_ids2,
                    block_graphs=16, **common))
    ref2s = reference_gnn(node_obs2, adj2, params, aggregate=False, agent_ids=agent_ids2, **common)
    np.testing.assert_allclose(np.asarray(out2s), ref2s, rtol=1e-4, atol=1e-4)

    # ---- bf16 MXU path (v6e/v7x): f32 accumulation + f32 softmax, loose tolerance ----
    out_pool_bf16 = jax.block_until_ready(
        gnn_forward(node_obs, adj, params, aggregate=True, use_bf16=True, **common))
    assert np.all(np.isfinite(np.asarray(out_pool_bf16)))
    np.testing.assert_allclose(np.asarray(out_pool_bf16), ref_pool, rtol=1e-1, atol=1e-1)

    out_sel_bf16 = jax.block_until_ready(
        gnn_forward(node_obs, adj, params, aggregate=False, agent_ids=agent_ids,
                    use_bf16=True, **common))
    np.testing.assert_allclose(np.asarray(out_sel_bf16), ref_sel, rtol=1e-1, atol=1e-1)

    print("KERNEL_OK")
</pallas_src>

<mosaic_0001>
module attributes {stable_mosaic.version = 11 : i64} {
  func.func @_gnn_pool_kernel(%arg0: i32, %arg1: memref<128x16xf32, #tpu.memory_space<vmem>>, %arg2: memref<1x128x128xf32, #tpu.memory_space<vmem>>, %arg3: memref<16x136xf32, #tpu.memory_space<vmem>>, %arg4: memref<1x136xf32, #tpu.memory_space<vmem>>, %arg5: memref<16x128xf32, #tpu.memory_space<vmem>>, %arg6: memref<4x128xf32, #tpu.memory_space<vmem>>) attributes {dimension_semantics = [#tpu.dimension_semantics<parallel>], iteration_bounds = array<i64: 1>, scalar_prefetch = 0 : i64, scratch_operands = 0 : i64, tpu.core_type = #tpu.core_type<tc>, window_params = [{transform_indices = @transform_0, window_bounds = array<i64: 128, 16>}, {transform_indices = @transform_1, window_bounds = array<i64: 1, 128, 128>}, {pipeline_mode = #tpu.pipeline_mode<synchronous>, transform_indices = @transform_2, window_bounds = array<i64: 16, 136>}, {pipeline_mode = #tpu.pipeline_mode<synchronous>, transform_indices = @transform_3, window_bounds = array<i64: 1, 136>}, {pipeline_mode = #tpu.pipeline_mode<synchronous>, transform_indices = @transform_4, window_bounds = array<i64: 16, 128>}, {transform_indices = @transform_5, window_bounds = array<i64: 4, 128>}]} {
    %c0 = arith.constant 0 : index
    %c0_0 = arith.constant 0 : index
    %0 = vector.load %arg1[%c0, %c0_0] : memref<128x16xf32, #tpu.memory_space<vmem>>, vector<128x16xf32>
    %c0_1 = arith.constant 0 : index
    %c0_2 = arith.constant 0 : index
    %1 = vector.load %arg3[%c0_1, %c0_2] : memref<16x136xf32, #tpu.memory_space<vmem>>, vector<16x136xf32>
    %cst = arith.constant dense<0.000000e+00> : vector<128x136xf32>
    %2 = tpu.matmul %0, %1, %cst {dimension_numbers = #tpu.dot_dimension_numbers<[1], [0], [0], [1], [0, 0, 1, 1], [], []>} : vector<128x16xf32>, vector<16x136xf32>, vector<128x136xf32> -> vector<128x136xf32>
    %c0_3 = arith.constant 0 : index
    %c0_4 = arith.constant 0 : index
    %3 = vector.load %arg4[%c0_3, %c0_4] : memref<1x136xf32, #tpu.memory_space<vmem>>, vector<1x136xf32>
    %4 = vector.broadcast %3 : vector<1x136xf32> to vector<128x136xf32>
    %5 = arith.addf %2, %4 : vector<128x136xf32>
    %6 = vector.shape_cast %5 : vector<128x136xf32> to vector<1x128x136xf32>
    %7 = vector.extract_strided_slice %6 {offsets = [0, 0, 0], sizes = [1, 128, 32], strides = [1, 1, 1]} : vector<1x128x136xf32> to vector<1x128x32xf32>
    %8 = vector.extract_strided_slice %6 {offsets = [0, 0, 32], sizes = [1, 128, 32], strides = [1, 1, 1]} : vector<1x128x136xf32> to vector<1x128x32xf32>
    %9 = vector.extract_strided_slice %6 {offsets = [0, 0, 64], sizes = [1, 128, 32], strides = [1, 1, 1]} : vector<1x128x136xf32> to vector<1x128x32xf32>
    %10 = vector.extract_strided_slice %6 {offsets = [0, 0, 96], sizes = [1, 128, 32], strides = [1, 1, 1]} : vector<1x128x136xf32> to vector<1x128x32xf32>
    %11 = vector.extract_strided_slice %6 {offsets = [0, 0, 128], sizes = [1, 128, 1], strides = [1, 1, 1]} : vector<1x128x136xf32> to vector<1x128x1xf32>
    %c0_5 = arith.constant 0 : index
    %c0_6 = arith.constant 0 : index
    %c0_7 = arith.constant 0 : index
    %12 = vector.load %arg2[%c0_5, %c0_6, %c0_7] : memref<1x128x128xf32, #tpu.memory_space<vmem>>, vector<1x128x128xf32>
    %cst_8 = arith.constant 0.000000e+00 : f32
    %13 = vector.broadcast %cst_8 : f32 to vector<1x128x128xf32>
    %14 = arith.cmpf ogt, %12, %13 : vector<1x128x128xf32>
    "tpu.trace_start"() <{level = 10 : i32, message = "bid,bjd->bij"}> : () -> ()
    %cst_9 = arith.constant dense<0.000000e+00> : vector<1x128x128xf32>
    %15 = tpu.matmul %7, %8, %cst_9 {dimension_numbers = #tpu.dot_dimension_numbers<[2], [2], [1], [1], [0, 0, 0, 1, 1, 1], [0], [0]>} : vector<1x128x32xf32>, vector<1x128x32xf32>, vector<1x128x128xf32> -> vector<1x128x128xf32>
    "tpu.trace_stop"() : () -> ()
    %16 = vector.broadcast %11 : vector<1x128x1xf32> to vector<1x128x128xf32>
    %17 = arith.mulf %12, %16 : vector<1x128x128xf32>
    %18 = arith.addf %15, %17 : vector<1x128x128xf32>
    %cst_10 = arith.constant 0.176776692 : f32
    %19 = vector.broadcast %cst_10 : f32 to vector<1x128x128xf32>
    %20 = arith.mulf %18, %19 : vector<1x128x128xf32>
    %cst_11 = arith.constant -1.000000e+30 : f32
    %21 = vector.broadcast %cst_11 : f32 to vector<1x128x128xf32>
    %22 = arith.select %14, %20, %21 : vector<1x128x128xi1>, vector<1x128x128xf32>
    %cst_12 = arith.constant dense<0xFF800000> : vector<1x128xf32>
    %23 = vector.multi_reduction <maximumf>, %22, %cst_12 [2] : vector<1x128x128xf32> to vector<1x128xf32>
    %24 = vector.shape_cast %23 : vector<1x128xf32> to vector<1x128x1xf32>
    %25 = vector.broadcast %24 : vector<1x128x1xf32> to vector<1x128x128xf32>
    %26 = arith.subf %22, %25 : vector<1x128x128xf32>
    %27 = math.exp %26 : vector<1x128x128xf32>
    %28 = arith.extui %14 : vector<1x128x128xi1> to vector<1x128x128xi32>
    %29 = arith.sitofp %28 : vector<1x128x128xi32> to vector<1x128x128xf32>
    %30 = arith.mulf %27, %29 : vector<1x128x128xf32>
    %cst_13 = arith.constant dense<0.000000e+00> : vector<1x128xf32>
    %31 = vector.multi_reduction <add>, %30, %cst_13 [2] : vector<1x128x128xf32> to vector<1x128xf32>
    %32 = vector.shape_cast %31 : vector<1x128xf32> to vector<1x128x1xf32>
    %cst_14 = arith.constant 0.000000e+00 : f32
    %33 = vector.broadcast %cst_14 : f32 to vector<1x128x1xf32>
    %34 = arith.cmpf ogt, %32, %33 : vector<1x128x1xf32>
    %cst_15 = arith.constant 1.000000e+00 : f32
    %35 = vector.broadcast %cst_15 : f32 to vector<1x128x1xf32>
    %36 = arith.select %34, %32, %35 : vector<1x128x1xi1>, vector<1x128x1xf32>
    %37 = tpu.reciprocal %36 {approx = true} : vector<1x128x1xf32> -> vector<1x128x1xf32>
    %38 = arith.mulf %36, %37 : vector<1x128x1xf32>
    %cst_16 = arith.constant 2.000000e+00 : f32
    %39 = vector.broadcast %cst_16 : f32 to vector<1x128x1xf32>
    %40 = arith.subf %39, %38 : vector<1x128x1xf32>
    %41 = arith.mulf %37, %40 : vector<1x128x1xf32>
    %42 = vector.broadcast %41 : vector<1x128x1xf32> to vector<1x128x128xf32>
    %43 = arith.mulf %30, %42 : vector<1x128x128xf32>
    %cst_17 = arith.constant 0.000000e+00 : f32
    %44 = vector.shape_cast %34 : vector<1x128x1xi1> to vector<1x128x1xi1>
    %45 = vector.broadcast %44 : vector<1x128x1xi1> to vector<1x128x128xi1>
    %46 = vector.broadcast %cst_17 : f32 to vector<1x128x128xf32>
    %47 = arith.select %45, %43, %46 : vector<1x128x128xi1>, vector<1x128x128xf32>
    %cst_18 = arith.constant dense<0.000000e+00> : vector<1x128xf32>
    %48 = vector.multi_reduction <add>, %47, %cst_18 [1] : vector<1x128x128xf32> to vector<1x128xf32>
    %49 = vector.shape_cast %48 : vector<1x128xf32> to vector<1x128x1xf32>
    %50 = vector.broadcast %49 : vector<1x128x1xf32> to vector<1x128x32xf32>
    %51 = arith.mulf %50, %10 : vector<1x128x32xf32>
    %52 = arith.addf %9, %51 : vector<1x128x32xf32>
    %c0_19 = arith.constant 0 : index
    %c0_20 = arith.constant 0 : index
    %53 = vector.load %arg5[%c0_19, %c0_20] : memref<16x128xf32, #tpu.memory_space<vmem>>, vector<16x128xf32>
    %54 = vector.shape_cast %53 : vector<16x128xf32> to vector<1x16x128xf32>
    "tpu.trace_start"() <{level = 10 : i32, message = "bgJ,bJd->bgd"}> : () -> ()
    %cst_21 = arith.constant dense<0.000000e+00> : vector<1x16x32xf32>
    %55 = tpu.matmul %54, %52, %cst_21 {dimension_numbers = #tpu.dot_dimension_numbers<[2], [1], [1], [2], [0, 0, 0, 1, 1, 2], [0], [0]>} : vector<1x16x128xf32>, vector<1x128x32xf32>, vector<1x16x32xf32> -> vector<1x16x32xf32>
    "tpu.trace_stop"() : () -> ()
    %56 = vector.shape_cast %55 : vector<1x16x32xf32> to vector<16x32xf32>
    %57 = vector.extract_strided_slice %56 {offsets = [0, 0], sizes = [4, 32], strides = [1, 1]} : vector<16x32xf32> to vector<4x32xf32>
    %58 = vector.extract_strided_slice %56 {offsets = [4, 0], sizes = [4, 32], strides = [1, 1]} : vector<16x32xf32> to vector<4x32xf32>
    %59 = vector.extract_strided_slice %56 {offsets = [8, 0], sizes = [4, 32], strides = [1, 1]} : vector<16x32xf32> to vector<4x32xf32>
    %60 = vector.extract_strided_slice %56 {offsets = [12, 0], sizes = [4, 32], strides = [1, 1]} : vector<16x32xf32> to vector<4x32xf32>
    %61 = tpu.concatenate %57, %58, %59, %60 in 1 : vector<4x32xf32>, vector<4x32xf32>, vector<4x32xf32>, vector<4x32xf32> -> vector<4x128xf32>
    %c0_22 = arith.constant 0 : index
    %c0_23 = arith.constant 0 : index
    %62 = vector.load %arg6[%c0_22, %c0_23] : memref<4x128xf32, #tpu.memory_space<vmem>>, vector<4x128xf32>
    tpu.vector_store %arg6[%c0_22, %c0_23], %61 {strides = array<i32>} : memref<4x128xf32, #tpu.memory_space<vmem>>, vector<4x128xf32>,
    return
  }
  func.func @transform_0(%arg0: i32) -> (i32, i32) {
    %c0_i32 = arith.constant 0 : i32
    %c0_i32_0 = arith.constant 0 : i32
    return %arg0, %c0_i32 : i32, i32
  }
  func.func @transform_1(%arg0: i32) -> (i32, i32, i32) {
    %c0_i32 = arith.constant 0 : i32
    %c0_i32_0 = arith.constant 0 : i32
    %c0_i32_1 = arith.constant 0 : i32
    return %arg0, %c0_i32, %c0_i32_0 : i32, i32, i32
  }
  func.func @transform_2(%arg0: i32) -> (i32, i32) {
    %c0_i32 = arith.constant 0 : i32
    %c0_i32_0 = arith.constant 0 : i32
    %c0_i32_1 = arith.constant 0 : i32
    return %c0_i32, %c0_i32_0 : i32, i32
  }
  func.func @transform_3(%arg0: i32) -> (i32, i32) {
    %c0_i32 = arith.constant 0 : i32
    %c0_i32_0 = arith.constant 0 : i32
    %c0_i32_1 = arith.constant 0 : i32
    return %c0_i32, %c0_i32_0 : i32, i32
  }
  func.func @transform_4(%arg0: i32) -> (i32, i32) {
    %c0_i32 = arith.constant 0 : i32
    %c0_i32_0 = arith.constant 0 : i32
    %c0_i32_1 = arith.constant 0 : i32
    return %c0_i32, %c0_i32_0 : i32, i32
  }
  func.func @transform_5(%arg0: i32) -> (i32, i32) {
    %c0_i32 = arith.constant 0 : i32
    %c0_i32_0 = arith.constant 0 : i32
    return %arg0, %c0_i32 : i32, i32
  }
}

</mosaic_0001>

<llo_original>
// kernel: tpu_custom_call.1
$region0: #{tpu_custom_call.1}
  #allocation0 [shape = 'u32[]', space=smem, size = 0x4, offset = 0x4, fixed_abs, tag = 'smem constant byte address 0x4 - core index']
  #allocation1 [shape = 'u32[72,128]{1,0:T(1,128)}', space=vmem, size = 0x9000, scoped, tag = 'internal scratch']
  %s0 = inlined_call_operand.vmem [shape: f32[128,16], index: 0, kind: input, shape index: {}]
  %s1 = inlined_call_operand.vmem [shape: f32[1,128,128], index: 1, kind: input, shape index: {}]
  %s2 = inlined_call_operand.hbm [shape: f32[16,136], index: 2, kind: input, shape index: {}]
  %s3 = inlined_call_operand.hbm [shape: f32[1,136], index: 3, kind: input, shape index: {}]
  %s4 = inlined_call_operand.vmem [shape: f32[16,128], index: 4, kind: input, shape index: {}]
  %s5 = inlined_call_operand.hbm [shape: f32[4,128], index: 5, kind: output, shape index: {}]
  %s6 = sld [smem:[#allocation0]]
  $region38: #{tpu_custom_call.1} parent=0
    _
  %s8 = ssub.s32 1, %s6
  %s9 = scalar_select 0, %s8, %s6
  $region1: #{tpu_custom_call.1} parent=0
    #allocation2 [shape = 'u8[16384]{0}', space=vmem, size = 0x4000, scoped, tag = 'input window, operand 2, single buffered']
    #allocation3 [shape = 's32[1]{0}', space=sflag, size = 0x4, scoped, tag = 'scoped memory for tpu_custom_call.1']
    #allocation4 [shape = 's32[1]{0}', space=sflag, size = 0x4, scoped, tag = 'scoped memory for tpu_custom_call.1']
    #allocation5 [shape = 'u8[1024]{0}', space=vmem, size = 0x400, scoped, tag = 'input window, operand 3, single buffered']
    #allocation6 [shape = 's32[1]{0}', space=sflag, size = 0x4, scoped, tag = 'scoped memory for tpu_custom_call.1']
    #allocation7 [shape = 'u8[2048]{0}', space=vmem, size = 0x800, scoped, tag = 'output window, operand 0, single buffered']
    %10 = vsyncpa [#allocation3], 0
    %11 = vsyncpa [#allocation6], 0
    %12 = vsyncpa [#allocation4], 0
    // Predicated region
    $region2: #{tpu_custom_call.1} parent=1 // pred_check
      _
    $region3: #{tpu_custom_call.1} parent=1 // pred_check_branch
      %14 = sbr.rel (0) target = $region5
    $region4: #{tpu_custom_call.1} parent=1 // pred_region
      _
    $region5: #{tpu_custom_call.1} parent=1 // pred_fallthru
      _
    // Predicated region
    $region6: #{tpu_custom_call.1} parent=1 // pred_check
      _
    $region7: #{tpu_custom_call.1} parent=1 // pred_check_branch
      %16 = sbr.rel (0) target = $region9
    $region8: #{tpu_custom_call.1} parent=1 // pred_region
      _
    $region9: #{tpu_custom_call.1} parent=1 // pred_fallthru
      _
    // Predicated region
    $region10: #{tpu_custom_call.1} parent=1 // pred_check
      _
    $region11: #{tpu_custom_call.1} parent=1 // pred_check_branch
      %18 = sbr.rel (0) target = $region13
    $region12: #{tpu_custom_call.1} parent=1 // pred_region
      %20 = vsyncadd [#allocation3], 0
      %s21 = sshll.u32 %s2, 4
      %s22 = int_to_ptr.hbm [resolvable:$true] %s21
      %s23 = sshll.u32 [#allocation2], 4
      %s24 = int_to_ptr.vmem [resolvable:$true] %s23
      %29 = dma.hbm_to_vmem [thread:$0]  %s22, 512, %s24, [#allocation3], 256, 256, 16
    $region13: #{tpu_custom_call.1} parent=1 // pred_fallthru
      _
    // Predicated region
    $region14: #{tpu_custom_call.1} parent=1 // pred_check
      _
    $region15: #{tpu_custom_call.1} parent=1 // pred_check_branch
      %31 = sbr.rel (0) target = $region17
    $region16: #{tpu_custom_call.1} parent=1 // pred_region
      %33 = vsyncadd [#allocation6], 0
      %s35 = sshll.u32 %s3, 4
      %s36 = int_to_ptr.hbm [resolvable:$true] %s35
      %s37 = sshll.u32 [#allocation5], 4
      %s38 = int_to_ptr.vmem [resolvable:$true] %s37
      %40 = dma.hbm_to_vmem [thread:$0]  %s36, 32, %s38, [#allocation6]
    $region17: #{tpu_custom_call.1} parent=1 // pred_fallthru
      _
    // Predicated region
    $region18: #{tpu_custom_call.1} parent=1 // pred_check
      _
    $region19: #{tpu_custom_call.1} parent=1 // pred_check_branch
      %42 = sbr.rel (0) target = $region21
    $region20: #{tpu_custom_call.1} parent=1 // pred_region
      _
    $region21: #{tpu_custom_call.1} parent=1 // pred_fallthru
      _
    // Predicated region
    $region22: #{tpu_custom_call.1} parent=1 // pred_check
      _
    $region23: #{tpu_custom_call.1} parent=1 // pred_check_branch
      %44 = sbr.rel (0) target = $region25
    $region24: #{tpu_custom_call.1} parent=1 // pred_region
      %46 = dma.done [#allocation3], 512
    $region25: #{tpu_custom_call.1} parent=1 // pred_fallthru
      _
    // Predicated region
    $region26: #{tpu_custom_call.1} parent=1 // pred_check
      _
    $region27: #{tpu_custom_call.1} parent=1 // pred_check_branch
      %48 = sbr.rel (0) target = $region29
    $region28: #{tpu_custom_call.1} parent=1 // pred_region
      %50 = dma.done [#allocation6], 32
    $region29: #{tpu_custom_call.1} parent=1 // pred_fallthru
      _
    %v51 = vld [vmem:[%s0] sm:$0xff]
    %v52 = vld [vmem:[%s0 + $0x8] sm:$0xff]
    %v53 = vld [vmem:[%s0 + $0x10] sm:$0xff]
    %v54 = vld [vmem:[%s0 + $0x18] sm:$0xff]
    %v55 = vld [vmem:[%s0 + $0x20] sm:$0xff]
    %v56 = vld [vmem:[%s0 + $0x28] sm:$0xff]
    %v57 = vld [vmem:[%s0 + $0x30] sm:$0xff]
    %v58 = vld [vmem:[%s0 + $0x38] sm:$0xff]
    %v59 = vld [vmem:[%s0 + $0x40] sm:$0xff]
    %v60 = vld [vmem:[%s0 + $0x48] sm:$0xff]
    %v61 = vld [vmem:[%s0 + $0x50] sm:$0xff]
    %v62 = vld [vmem:[%s0 + $0x58] sm:$0xff]
    %v63 = vld [vmem:[%s0 + $0x60] sm:$0xff]
    %v64 = vld [vmem:[%s0 + $0x68] sm:$0xff]
    %v65 = vld [vmem:[%s0 + $0x70] sm:$0xff]
    %v66 = vld [vmem:[%s0 + $0x78] sm:$0xff]
    %v67 = vld [vmem:[#allocation2] sm:$0xff]
    %v68 = vld [vmem:[#allocation2 + $0x8] sm:$0xff]
    %v69 = vld [vmem:[#allocation2 + $0x10] sm:$0xff]
    %v70 = vld [vmem:[#allocation2 + $0x18] sm:$0xff]
    %v71 = vld [vmem:[#allocation5] sm:$0x3]
    %v73 = vperm.slane %v71, 0
    %v74 = vperm.slane %v71, 1
    %vm77 = vcmask 130048
    %v79 = vsel %vm77, %v51, 0
    %v82 = vsel %vm77, %v52, 0
    %v85 = vsel %vm77, %v53, 0
    %v88 = vsel %vm77, %v54, 0
    %v91 = vsel %vm77, %v55, 0
    %v94 = vsel %vm77, %v56, 0
    %v97 = vsel %vm77, %v57, 0
    %v100 = vsel %vm77, %v58, 0
    %v103 = vsel %vm77, %v59, 0
    %v106 = vsel %vm77, %v60, 0
    %v109 = vsel %vm77, %v61, 0
    %v112 = vsel %vm77, %v62, 0
    %v115 = vsel %vm77, %v63, 0
    %v118 = vsel %vm77, %v64, 0
    %v121 = vsel %vm77, %v65, 0
    %v124 = vsel %vm77, %v66, 0
    %126 = vmatpush.msra.mxu0 0.0
    %127 = vmatpush.msra.mxu0 0.0
    %128 = vmatpush.msra.mxu0 0.0
    %129 = vmatpush.msra.mxu0 0.0
    %130 = vmatpush.msra.mxu0 0.0
    %131 = vmatpush.msra.mxu0 0.0
    %132 = vmatpush.msra.mxu0 0.0
    %133 = vmatpush.msra.mxu0 0.0
    %134 = vmatpush.msra.mxu0 0.0
    %135 = vmatpush.msra.mxu0 0.0
    %136 = vmatpush.msra.mxu0 0.0
    %137 = vmatpush.msra.mxu0 0.0
    %138 = vmatpush.msra.mxu0 0.0
    %139 = vmatpush.msra.mxu0 0.0
    %140 = vmatpush.msra.mxu0 %v69
    %141 = vmatpush.msra.mxu0 %v67
    %142 = vmatmul.f32.gmra.mxu0 %v79
    %v143 = vpop.f32.mrf.mxu0
    %v144 = vadd.f32 %v73, %v143
    %145 = vmatmul.f32.gmra.mxu0 %v82
    %v146 = vpop.f32.mrf.mxu0
    %v147 = vadd.f32 %v73, %v146
    %148 = vmatmul.f32.gmra.mxu0 %v85
    %v149 = vpop.f32.mrf.mxu0
    %v150 = vadd.f32 %v73, %v149
    %151 = vmatmul.f32.gmra.mxu0 %v88
    %v152 = vpop.f32.mrf.mxu0
    %v153 = vadd.f32 %v73, %v152
    %154 = vmatmul.f32.gmra.mxu0 %v91
    %v155 = vpop.f32.mrf.mxu0
    %v156 = vadd.f32 %v73, %v155
    %157 = vmatmul.f32.gmra.mxu0 %v94
    %v158 = vpop.f32.mrf.mxu0
    %v159 = vadd.f32 %v73, %v158
    %160 = vmatmul.f32.gmra.mxu0 %v97
    %v161 = vpop.f32.mrf.mxu0
    %v162 = vadd.f32 %v73, %v161
    %163 = vmatmul.f32.gmra.mxu0 %v100
    %v164 = vpop.f32.mrf.mxu0
    %v165 = vadd.f32 %v73, %v164
    %166 = vmatmul.f32.gmra.mxu0 %v103
    %v167 = vpop.f32.mrf.mxu0
    %v168 = vadd.f32 %v73, %v167
    %169 = vmatmul.f32.gmra.mxu0 %v106
    %v170 = vpop.f32.mrf.mxu0
    %v171 = vadd.f32 %v73, %v170
    %172 = vmatmul.f32.gmra.mxu0 %v109
    %v173 = vpop.f32.mrf.mxu0
    %v174 = vadd.f32 %v73, %v173
    %175 = vmatmul.f32.gmra.mxu0 %v112
    %v176 = vpop.f32.mrf.mxu0
    %v177 = vadd.f32 %v73, %v176
    %178 = vmatmul.f32.gmra.mxu0 %v115
    %v179 = vpop.f32.mrf.mxu0
    %v180 = vadd.f32 %v73, %v179
    %181 = vmatmul.f32.gmra.mxu0 %v118
    %v182 = vpop.f32.mrf.mxu0
    %v183 = vadd.f32 %v73, %v182
    %184 = vmatmul.f32.gmra.mxu0 %v121
    %v185 = vpop.f32.mrf.mxu0
    %v186 = vadd.f32 %v73, %v185
    %187 = vmatmul.f32.gmra.mxu0 %v124
    %v188 = vpop.f32.mrf.mxu0
    %v189 = vadd.f32 %v73, %v188
    %190 = vdwg.mxu0
    %191 = vmatpush.msra.mxu0 0.0
    %192 = vmatpush.msra.mxu0 0.0
    %193 = vmatpush.msra.mxu0 0.0
    %194 = vmatpush.msra.mxu0 0.0
    %195 = vmatpush.msra.mxu0 0.0
    %196 = vmatpush.msra.mxu0 0.0
    %197 = vmatpush.msra.mxu0 0.0
    %198 = vmatpush.msra.mxu0 0.0
    %199 = vmatpush.msra.mxu0 0.0
    %200 = vmatpush.msra.mxu0 0.0
    %201 = vmatpush.msra.mxu0 0.0
    %202 = vmatpush.msra.mxu0 0.0
    %203 = vmatpush.msra.mxu0 0.0
    %204 = vmatpush.msra.mxu0 0.0
    %205 = vmatpush.msra.mxu0 %v70
    %206 = vmatpush.msra.mxu0 %v68
    %207 = vmatmul.f32.gmra.mxu0 %v79
    %v208 = vpop.f32.mrf.mxu0
    %v209 = vadd.f32 %v74, %v208
    %210 = vmatmul.f32.gmra.mxu0 %v82
    %v211 = vpop.f32.mrf.mxu0
    %v212 = vadd.f32 %v74, %v211
    %213 = vmatmul.f32.gmra.mxu0 %v85
    %v214 = vpop.f32.mrf.mxu0
    %v215 = vadd.f32 %v74, %v214
    %216 = vmatmul.f32.gmra.mxu0 %v88
    %v217 = vpop.f32.mrf.mxu0
    %v218 = vadd.f32 %v74, %v217
    %219 = vmatmul.f32.gmra.mxu0 %v91
    %v220 = vpop.f32.mrf.mxu0
    %v221 = vadd.f32 %v74, %v220
    %222 = vmatmul.f32.gmra.mxu0 %v94
    %v223 = vpop.f32.mrf.mxu0
    %v224 = vadd.f32 %v74, %v223
    %225 = vmatmul.f32.gmra.mxu0 %v97
    %v226 = vpop.f32.mrf.mxu0
    %v227 = vadd.f32 %v74, %v226
    %228 = vmatmul.f32.gmra.mxu0 %v100
    %v229 = vpop.f32.mrf.mxu0
    %v230 = vadd.f32 %v74, %v229
    %231 = vmatmul.f32.gmra.mxu0 %v103
    %v232 = vpop.f32.mrf.mxu0
    %v233 = vadd.f32 %v74, %v232
    %234 = vmatmul.f32.gmra.mxu0 %v106
    %v235 = vpop.f32.mrf.mxu0
    %v236 = vadd.f32 %v74, %v235
    %237 = vmatmul.f32.gmra.mxu0 %v109
    %v238 = vpop.f32.mrf.mxu0
    %v239 = vadd.f32 %v74, %v238
    %240 = vmatmul.f32.gmra.mxu0 %v112
    %v241 = vpop.f32.mrf.mxu0
    %v242 = vadd.f32 %v74, %v241
    %243 = vmatmul.f32.gmra.mxu0 %v115
    %v244 = vpop.f32.mrf.mxu0
    %v245 = vadd.f32 %v74, %v244
    %246 = vmatmul.f32.gmra.mxu0 %v118
    %v247 = vpop.f32.mrf.mxu0
    %v248 = vadd.f32 %v74, %v247
    %249 = vmatmul.f32.gmra.mxu0 %v121
    %v250 = vpop.f32.mrf.mxu0
    %v251 = vadd.f32 %v74, %v250
    %252 = vmatmul.f32.gmra.mxu0 %v124
    %v253 = vpop.f32.mrf.mxu0
    %v254 = vadd.f32 %v74, %v253
    %255 = vdwg.mxu0
    %v256 = vld [vmem:[%s1] sm:$0xff]
    %v257 = vld [vmem:[%s1 + $0x8] sm:$0xff]
    %v258 = vld [vmem:[%s1 + $0x10] sm:$0xff]
    %v259 = vld [vmem:[%s1 + $0x18] sm:$0xff]
    %v260 = vld [vmem:[%s1 + $0x20] sm:$0xff]
    %v261 = vld [vmem:[%s1 + $0x28] sm:$0xff]
    %v262 = vld [vmem:[%s1 + $0x30] sm:$0xff]
    %v263 = vld [vmem:[%s1 + $0x38] sm:$0xff]
    %v264 = vld [vmem:[%s1 + $0x40] sm:$0xff]
    %v265 = vld [vmem:[%s1 + $0x48] sm:$0xff]
    %v266 = vld [vmem:[%s1 + $0x50] sm:$0xff]
    %v267 = vld [vmem:[%s1 + $0x58] sm:$0xff]
    %v268 = vld [vmem:[%s1 + $0x60] sm:$0xff]
    %v269 = vld [vmem:[%s1 + $0x68] sm:$0xff]
    %v270 = vld [vmem:[%s1 + $0x70] sm:$0xff]
    %v271 = vld [vmem:[%s1 + $0x78] sm:$0xff]
    %vm272 = vcmp.gt.f32.partialorder %v256, 0.0
    %vm273 = vcmp.gt.f32.partialorder %v257, 0.0
    %vm274 = vcmp.gt.f32.partialorder %v258, 0.0
    %vm275 = vcmp.gt.f32.partialorder %v259, 0.0
    %vm276 = vcmp.gt.f32.partialorder %v260, 0.0
    %vm277 = vcmp.gt.f32.partialorder %v261, 0.0
    %vm278 = vcmp.gt.f32.partialorder %v262, 0.0
    %vm279 = vcmp.gt.f32.partialorder %v263, 0.0
    %vm280 = vcmp.gt.f32.partialorder %v264, 0.0
    %vm281 = vcmp.gt.f32.partialorder %v265, 0.0
    %vm282 = vcmp.gt.f32.partialorder %v266, 0.0
    %vm283 = vcmp.gt.f32.partialorder %v267, 0.0
    %vm284 = vcmp.gt.f32.partialorder %v268, 0.0
    %vm285 = vcmp.gt.f32.partialorder %v269, 0.0
    %vm286 = vcmp.gt.f32.partialorder %v270, 0.0
    %vm287 = vcmp.gt.f32.partialorder %v271, 0.0
    %289 = vset.pattern.permute.xlu0 0
    %290 = vperm.xlu0 %289, %v209
    %v291 = vpop.permute.xlu0 %290
    %294 = vset.pattern.permute.xlu0 0
    %295 = vperm.xlu0 %294, %v212
    %v296 = vpop.permute.xlu0 %295
    %299 = vset.pattern.permute.xlu0 0
    %300 = vperm.xlu0 %299, %v215
    %v301 = vpop.permute.xlu0 %300
    %304 = vset.pattern.permute.xlu0 0
    %305 = vperm.xlu0 %304, %v218
    %v306 = vpop.permute.xlu0 %305
    %309 = vset.pattern.permute.xlu0 0
    %310 = vperm.xlu0 %309, %v221
    %v311 = vpop.permute.xlu0 %310
    %314 = vset.pattern.permute.xlu0 0
    %315 = vperm.xlu0 %314, %v224
    %v316 = vpop.permute.xlu0 %315
    %319 = vset.pattern.permute.xlu0 0
    %320 = vperm.xlu0 %319, %v227
    %v321 = vpop.permute.xlu0 %320
    %324 = vset.pattern.permute.xlu0 0
    %325 = vperm.xlu0 %324, %v230
    %v326 = vpop.permute.xlu0 %325
    %329 = vset.pattern.permute.xlu0 0
    %330 = vperm.xlu0 %329, %v233
    %v331 = vpop.permute.xlu0 %330
    %334 = vset.pattern.permute.xlu0 0
    %335 = vperm.xlu0 %334, %v236
    %v336 = vpop.permute.xlu0 %335
    %339 = vset.pattern.permute.xlu0 0
    %340 = vperm.xlu0 %339, %v239
    %v341 = vpop.permute.xlu0 %340
    %344 = vset.pattern.permute.xlu0 0
    %345 = vperm.xlu0 %344, %v242
    %v346 = vpop.permute.xlu0 %345
    %349 = vset.pattern.permute.xlu0 0
    %350 = vperm.xlu0 %349, %v245
    %v351 = vpop.permute.xlu0 %350
    %354 = vset.pattern.permute.xlu0 0
    %355 = vperm.xlu0 %354, %v248
    %v356 = vpop.permute.xlu0 %355
    %359 = vset.pattern.permute.xlu0 0
    %360 = vperm.xlu0 %359, %v251
    %v361 = vpop.permute.xlu0 %360
    %364 = vset.pattern.permute.xlu0 0
    %365 = vperm.xlu0 %364, %v254
    %v366 = vpop.permute.xlu0 %365
    %v368 = vmul.f32 %v256, %v291
    %v369 = vmul.f32 %v257, %v296
    %v370 = vmul.f32 %v258, %v301
    %v371 = vmul.f32 %v259, %v306
    %v372 = vmul.f32 %v260, %v311
    %v373 = vmul.f32 %v261, %v316
    %v374 = vmul.f32 %v262, %v321
    %v375 = vmul.f32 %v263, %v326
    %v376 = vmul.f32 %v264, %v331
    %v377 = vmul.f32 %v265, %v336
    %v378 = vmul.f32 %v266, %v341
    %v379 = vmul.f32 %v267, %v346
    %v380 = vmul.f32 %v268, %v351
    %v381 = vmul.f32 %v269, %v356
    %v382 = vmul.f32 %v270, %v361
    %v383 = vmul.f32 %v271, %v366
    %400 = vrot.lane.b32.xlu0 %v144, 96
    %v401 = vpop.permute.xlu0 %400
    %402 = vrot.lane.b32.xlu0 %v147, 96
    %v403 = vpop.permute.xlu0 %402
    %404 = vrot.lane.b32.xlu0 %v150, 96
    %v405 = vpop.permute.xlu0 %404
    %406 = vrot.lane.b32.xlu0 %v153, 96
    %v407 = vpop.permute.xlu0 %406
    %408 = vrot.lane.b32.xlu0 %v156, 96
    %v409 = vpop.permute.xlu0 %408
    %410 = vrot.lane.b32.xlu0 %v159, 96
    %v411 = vpop.permute.xlu0 %410
    %412 = vrot.lane.b32.xlu0 %v162, 96
    %v413 = vpop.permute.xlu0 %412
    %414 = vrot.lane.b32.xlu0 %v165, 96
    %v415 = vpop.permute.xlu0 %414
    %416 = vrot.lane.b32.xlu0 %v168, 96
    %v417 = vpop.permute.xlu0 %416
    %418 = vrot.lane.b32.xlu0 %v171, 96
    %v419 = vpop.permute.xlu0 %418
    %420 = vrot.lane.b32.xlu0 %v174, 96
    %v421 = vpop.permute.xlu0 %420
    %422 = vrot.lane.b32.xlu0 %v177, 96
    %v423 = vpop.permute.xlu0 %422
    %424 = vrot.lane.b32.xlu0 %v180, 96
    %v425 = vpop.permute.xlu0 %424
    %426 = vrot.lane.b32.xlu0 %v183, 96
    %v427 = vpop.permute.xlu0 %426
    %428 = vrot.lane.b32.xlu0 %v186, 96
    %v429 = vpop.permute.xlu0 %428
    %430 = vrot.lane.b32.xlu0 %v189, 96
    %v431 = vpop.permute.xlu0 %430
    %vm432 = vcmask 261120
    %v433 = vsel %vm432, %v144, 0
    %v435 = vsel %vm432, %v147, 0
    %v437 = vsel %vm432, %v150, 0
    %v439 = vsel %vm432, %v153, 0
    %v441 = vsel %vm432, %v156, 0
    %v443 = vsel %vm432, %v159, 0
    %v445 = vsel %vm432, %v162, 0
    %v447 = vsel %vm432, %v165, 0
    %v449 = vsel %vm432, %v168, 0
    %v451 = vsel %vm432, %v171, 0
    %v453 = vsel %vm432, %v174, 0
    %v455 = vsel %vm432, %v177, 0
    %v457 = vsel %vm432, %v180, 0
    %v459 = vsel %vm432, %v183, 0
    %v461 = vsel %vm432, %v186, 0
    %v463 = vsel %vm432, %v189, 0
    %v465 = vsel %vm432, %v401, 0
    %v467 = vsel %vm432, %v403, 0
    %v469 = vsel %vm432, %v405, 0
    %v471 = vsel %vm432, %v407, 0
    %v473 = vsel %vm432, %v409, 0
    %v475 = vsel %vm432, %v411, 0
    %v477 = vsel %vm432, %v413, 0
    %v479 = vsel %vm432, %v415, 0
    %v481 = vsel %vm432, %v417, 0
    %v483 = vsel %vm432, %v419, 0
    %v485 = vsel %vm432, %v421, 0
    %v487 = vsel %vm432, %v423, 0
    %v489 = vsel %vm432, %v425, 0
    %v491 = vsel %vm432, %v427, 0
    %v493 = vsel %vm432, %v429, 0
    %v495 = vsel %vm432, %v431, 0
    %497 = vmatpush.xpose.msra.mxu0 %v495
    %498 = vmatpush.xpose.msra.mxu0 %v493
    %499 = vmatpush.xpose.msra.mxu0 %v491
    %500 = vmatpush.xpose.msra.mxu0 %v489
    %501 = vmatpush.xpose.msra.mxu0 %v487
    %502 = vmatpush.xpose.msra.mxu0 %v485
    %503 = vmatpush.xpose.msra.mxu0 %v483
    %504 = vmatpush.xpose.msra.mxu0 %v481
    %505 = vmatpush.xpose.msra.mxu0 %v479
    %506 = vmatpush.xpose.msra.mxu0 %v477
    %507 = vmatpush.xpose.msra.mxu0 %v475
    %508 = vmatpush.xpose.msra.mxu0 %v473
    %509 = vmatpush.xpose.msra.mxu0 %v471
    %510 = vmatpush.xpose.msra.mxu0 %v469
    %511 = vmatpush.xpose.msra.mxu0 %v467
    %512 = vmatpush.xpose.msra.mxu0 %v465
    %513 = vmatmul.f32.gmra.mxu0 %v433
    %v514 = vpop.f32.mrf.mxu0
    %v515 = vadd.f32 %v368, %v514
    %516 = vmatmul.f32.gmra.mxu0 %v435
    %v517 = vpop.f32.mrf.mxu0
    %v518 = vadd.f32 %v369, %v517
    %519 = vmatmul.f32.gmra.mxu0 %v437
    %v520 = vpop.f32.mrf.mxu0
    %v521 = vadd.f32 %v370, %v520
    %522 = vmatmul.f32.gmra.mxu0 %v439
    %v523 = vpop.f32.mrf.mxu0
    %v524 = vadd.f32 %v371, %v523
    %525 = vmatmul.f32.gmra.mxu0 %v441
    %v526 = vpop.f32.mrf.mxu0
    %v527 = vadd.f32 %v372, %v526
    %528 = vmatmul.f32.gmra.mxu0 %v443
    %v529 = vpop.f32.mrf.mxu0
    %v530 = vadd.f32 %v373, %v529
    %531 = vmatmul.f32.gmra.mxu0 %v445
    %v532 = vpop.f32.mrf.mxu0
    %v533 = vadd.f32 %v374, %v532
    %534 = vmatmul.f32.gmra.mxu0 %v447
    %v535 = vpop.f32.mrf.mxu0
    %v536 = vadd.f32 %v375, %v535
    %537 = vmatmul.f32.gmra.mxu0 %v449
    %v538 = vpop.f32.mrf.mxu0
    %v539 = vadd.f32 %v376, %v538
    %540 = vmatmul.f32.gmra.mxu0 %v451
    %v541 = vpop.f32.mrf.mxu0
    %v542 = vadd.f32 %v377, %v541
    %543 = vmatmul.f32.gmra.mxu0 %v453
    %v544 = vpop.f32.mrf.mxu0
    %v545 = vadd.f32 %v378, %v544
    %546 = vmatmul.f32.gmra.mxu0 %v455
    %v547 = vpop.f32.mrf.mxu0
    %v548 = vadd.f32 %v379, %v547
    %549 = vmatmul.f32.gmra.mxu0 %v457
    %v550 = vpop.f32.mrf.mxu0
    %v551 = vadd.f32 %v380, %v550
    %552 = vmatmul.f32.gmra.mxu0 %v459
    %v553 = vpop.f32.mrf.mxu0
    %v554 = vadd.f32 %v381, %v553
    %555 = vmatmul.f32.gmra.mxu0 %v461
    %v556 = vpop.f32.mrf.mxu0
    %v557 = vadd.f32 %v382, %v556
    %558 = vmatmul.f32.gmra.mxu0 %v463
    %v559 = vpop.f32.mrf.mxu0
    %v560 = vadd.f32 %v383, %v559
    %561 = vdwg.mxu0
    %v562 = vmul.f32 %v515, 0.17677669
    %v563 = vmul.f32 %v518, 0.17677669
    %v564 = vmul.f32 %v521, 0.17677669
    %v565 = vmul.f32 %v524, 0.17677669
    %v566 = vmul.f32 %v527, 0.17677669
    %v567 = vmul.f32 %v530, 0.17677669
    %v568 = vmul.f32 %v533, 0.17677669
    %v569 = vmul.f32 %v536, 0.17677669
    %v570 = vmul.f32 %v539, 0.17677669
    %v571 = vmul.f32 %v542, 0.17677669
    %v572 = vmul.f32 %v545, 0.17677669
    %v573 = vmul.f32 %v548, 0.17677669
    %v574 = vmul.f32 %v551, 0.17677669
    %v575 = vmul.f32 %v554, 0.17677669
    %v576 = vmul.f32 %v557, 0.17677669
    %v577 = vmul.f32 %v560, 0.17677669
    %v578 = vsel %vm272, %v562, -1e+30
    %v579 = vsel %vm273, %v563, -1e+30
    %v580 = vsel %vm274, %v564, -1e+30
    %v581 = vsel %vm275, %v565, -1e+30
    %v582 = vsel %vm276, %v566, -1e+30
    %v583 = vsel %vm277, %v567, -1e+30
    %v584 = vsel %vm278, %v568, -1e+30
    %v585 = vsel %vm279, %v569, -1e+30
    %v586 = vsel %vm280, %v570, -1e+30
    %v587 = vsel %vm281, %v571, -1e+30
    %v588 = vsel %vm282, %v572, -1e+30
    %v589 = vsel %vm283, %v573, -1e+30
    %v590 = vsel %vm284, %v574, -1e+30
    %v591 = vsel %vm285, %v575, -1e+30
    %v592 = vsel %vm286, %v576, -1e+30
    %v593 = vsel %vm287, %v577, -1e+30
    %594 = vmax.xlane.f32.xlu0 %v578
    %v595 = vpop.xlane.xlu0 %594
    %596 = vmax.xlane.f32.xlu0 %v579
    %v597 = vpop.xlane.xlu0 %596
    %598 = vmax.xlane.f32.xlu0 %v580
    %v599 = vpop.xlane.xlu0 %598
    %600 = vmax.xlane.f32.xlu0 %v581
    %v601 = vpop.xlane.xlu0 %600
    %602 = vmax.xlane.f32.xlu0 %v582
    %v603 = vpop.xlane.xlu0 %602
    %604 = vmax.xlane.f32.xlu0 %v583
    %v605 = vpop.xlane.xlu0 %604
    %606 = vmax.xlane.f32.xlu0 %v584
    %v607 = vpop.xlane.xlu0 %606
    %608 = vmax.xlane.f32.xlu0 %v585
    %v609 = vpop.xlane.xlu0 %608
    %610 = vmax.xlane.f32.xlu0 %v586
    %v611 = vpop.xlane.xlu0 %610
    %612 = vmax.xlane.f32.xlu0 %v587
    %v613 = vpop.xlane.xlu0 %612
    %614 = vmax.xlane.f32.xlu0 %v588
    %v615 = vpop.xlane.xlu0 %614
    %616 = vmax.xlane.f32.xlu0 %v589
    %v617 = vpop.xlane.xlu0 %616
    %618 = vmax.xlane.f32.xlu0 %v590
    %v619 = vpop.xlane.xlu0 %618
    %620 = vmax.xlane.f32.xlu0 %v591
    %v621 = vpop.xlane.xlu0 %620
    %622 = vmax.xlane.f32.xlu0 %v592
    %v623 = vpop.xlane.xlu0 %622
    %624 = vmax.xlane.f32.xlu0 %v593
    %v625 = vpop.xlane.xlu0 %624
    %v626 = vsub.f32 %v578, %v595
    %v627 = vsub.f32 %v579, %v597
    %v628 = vsub.f32 %v580, %v599
    %v629 = vsub.f32 %v581, %v601
    %v630 = vsub.f32 %v582, %v603
    %v631 = vsub.f32 %v583, %v605
    %v632 = vsub.f32 %v584, %v607
    %v633 = vsub.f32 %v585, %v609
    %v634 = vsub.f32 %v586, %v611
    %v635 = vsub.f32 %v587, %v613
    %v636 = vsub.f32 %v588, %v615
    %v637 = vsub.f32 %v589, %v617
    %v638 = vsub.f32 %v590, %v619
    %v639 = vsub.f32 %v591, %v621
    %v640 = vsub.f32 %v592, %v623
    %v641 = vsub.f32 %v593, %v625
    %v642 = vmul.f32 %v626, 1.442695
    %v643 = vpow.pop %v642
    %v644 = vmul.f32 %v627, 1.442695
    %v645 = vpow.pop %v644
    %v646 = vmul.f32 %v628, 1.442695
    %v647 = vpow.pop %v646
    %v648 = vmul.f32 %v629, 1.442695
    %v649 = vpow.pop %v648
    %v650 = vmul.f32 %v630, 1.442695
    %v651 = vpow.pop %v650
    %v652 = vmul.f32 %v631, 1.442695
    %v653 = vpow.pop %v652
    %v654 = vmul.f32 %v632, 1.442695
    %v655 = vpow.pop %v654
    %v656 = vmul.f32 %v633, 1.442695
    %v657 = vpow.pop %v656
    %v658 = vmul.f32 %v634, 1.442695
    %v659 = vpow.pop %v658
    %v660 = vmul.f32 %v635, 1.442695
    %v661 = vpow.pop %v660
    %v662 = vmul.f32 %v636, 1.442695
    %v663 = vpow.pop %v662
    %v664 = vmul.f32 %v637, 1.442695
    %v665 = vpow.pop %v664
    %v666 = vmul.f32 %v638, 1.442695
    %v667 = vpow.pop %v666
    %v668 = vmul.f32 %v639, 1.442695
    %v669 = vpow.pop %v668
    %v670 = vmul.f32 %v640, 1.442695
    %v671 = vpow.pop %v670
    %v672 = vmul.f32 %v641, 1.442695
    %v673 = vpow.pop %v672
    %v674 = vsel %vm272, 1, 0
    %v675 = vsel %vm273, 1, 0
    %v676 = vsel %vm274, 1, 0
    %v677 = vsel %vm275, 1, 0
    %v678 = vsel %vm276, 1, 0
    %v679 = vsel %vm277, 1, 0
    %v680 = vsel %vm278, 1, 0
    %v681 = vsel %vm279, 1, 0
    %v682 = vsel %vm280, 1, 0
    %v683 = vsel %vm281, 1, 0
    %v684 = vsel %vm282, 1, 0
    %v685 = vsel %vm283, 1, 0
    %v686 = vsel %vm284, 1, 0
    %v687 = vsel %vm285, 1, 0
    %v688 = vsel %vm286, 1, 0
    %v689 = vsel %vm287, 1, 0
    %v690 = vcvt.s32.f32 %v674
    %v691 = vcvt.s32.f32 %v675
    %v692 = vcvt.s32.f32 %v676
    %v693 = vcvt.s32.f32 %v677
    %v694 = vcvt.s32.f32 %v678
    %v695 = vcvt.s32.f32 %v679
    %v696 = vcvt.s32.f32 %v680
    %v697 = vcvt.s32.f32 %v681
    %v698 = vcvt.s32.f32 %v682
    %v699 = vcvt.s32.f32 %v683
    %v700 = vcvt.s32.f32 %v684
    %v701 = vcvt.s32.f32 %v685
    %v702 = vcvt.s32.f32 %v686
    %v703 = vcvt.s32.f32 %v687
    %v704 = vcvt.s32.f32 %v688
    %v705 = vcvt.s32.f32 %v689
    %v706 = vmul.f32 %v643, %v690
    %v707 = vmul.f32 %v645, %v691
    %v708 = vmul.f32 %v647, %v692
    %v709 = vmul.f32 %v649, %v693
    %v710 = vmul.f32 %v651, %v694
    %v711 = vmul.f32 %v653, %v695
    %v712 = vmul.f32 %v655, %v696
    %v713 = vmul.f32 %v657, %v697
    %v714 = vmul.f32 %v659, %v698
    %v715 = vmul.f32 %v661, %v699
    %v716 = vmul.f32 %v663, %v700
    %v717 = vmul.f32 %v665, %v701
    %v718 = vmul.f32 %v667, %v702
    %v719 = vmul.f32 %v669, %v703
    %v720 = vmul.f32 %v671, %v704
    %v721 = vmul.f32 %v673, %v705
    %722 = vadd.xlane.f32.xlu0 %v706
    %v723 = vpop.xlane.xlu0 %722
    %724 = vadd.xlane.f32.xlu0 %v707
    %v725 = vpop.xlane.xlu0 %724
    %726 = vadd.xlane.f32.xlu0 %v708
    %v727 = vpop.xlane.xlu0 %726
    %728 = vadd.xlane.f32.xlu0 %v709
    %v729 = vpop.xlane.xlu0 %728
    %730 = vadd.xlane.f32.xlu0 %v710
    %v731 = vpop.xlane.xlu0 %730
    %732 = vadd.xlane.f32.xlu0 %v711
    %v733 = vpop.xlane.xlu0 %732
    %734 = vadd.xlane.f32.xlu0 %v712
    %v735 = vpop.xlane.xlu0 %734
    %736 = vadd.xlane.f32.xlu0 %v713
    %v737 = vpop.xlane.xlu0 %736
    %738 = vadd.xlane.f32.xlu0 %v714
    %v739 = vpop.xlane.xlu0 %738
    %740 = vadd.xlane.f32.xlu0 %v715
    %v741 = vpop.xlane.xlu0 %740
    %742 = vadd.xlane.f32.xlu0 %v716
    %v743 = vpop.xlane.xlu0 %742
    %744 = vadd.xlane.f32.xlu0 %v717
    %v745 = vpop.xlane.xlu0 %744
    %746 = vadd.xlane.f32.xlu0 %v718
    %v747 = vpop.xlane.xlu0 %746
    %748 = vadd.xlane.f32.xlu0 %v719
    %v749 = vpop.xlane.xlu0 %748
    %750 = vadd.xlane.f32.xlu0 %v720
    %v751 = vpop.xlane.xlu0 %750
    %752 = vadd.xlane.f32.xlu0 %v721
    %v753 = vpop.xlane.xlu0 %752
    %vm754 = vcmp.gt.f32.partialorder %v723, 0.0
    %vm755 = vcmp.gt.f32.partialorder %v725, 0.0
    %vm756 = vcmp.gt.f32.partialorder %v727, 0.0
    %vm757 = vcmp.gt.f32.partialorder %v729, 0.0
    %vm758 = vcmp.gt.f32.partialorder %v731, 0.0
    %vm759 = vcmp.gt.f32.partialorder %v733, 0.0
    %vm760 = vcmp.gt.f32.partialorder %v735, 0.0
    %vm761 = vcmp.gt.f32.partialorder %v737, 0.0
    %vm762 = vcmp.gt.f32.partialorder %v739, 0.0
    %vm763 = vcmp.gt.f32.partialorder %v741, 0.0
    %vm764 = vcmp.gt.f32.partialorder %v743, 0.0
    %vm765 = vcmp.gt.f32.partialorder %v745, 0.0
    %vm766 = vcmp.gt.f32.partialorder %v747, 0.0
    %vm767 = vcmp.gt.f32.partialorder %v749, 0.0
    %vm768 = vcmp.gt.f32.partialorder %v751, 0.0
    %vm769 = vcmp.gt.f32.partialorder %v753, 0.0
    %v770 = vsel %vm754, %v723, 1.0
    %v771 = vsel %vm755, %v725, 1.0
    %v772 = vsel %vm756, %v727, 1.0
    %v773 = vsel %vm757, %v729, 1.0
    %v774 = vsel %vm758, %v731, 1.0
    %v775 = vsel %vm759, %v733, 1.0
    %v776 = vsel %vm760, %v735, 1.0
    %v777 = vsel %vm761, %v737, 1.0
    %v778 = vsel %vm762, %v739, 1.0
    %v779 = vsel %vm763, %v741, 1.0
    %v780 = vsel %vm764, %v743, 1.0
    %v781 = vsel %vm765, %v745, 1.0
    %v782 = vsel %vm766, %v747, 1.0
    %v783 = vsel %vm767, %v749, 1.0
    %v784 = vsel %vm768, %v751, 1.0
    %v785 = vsel %vm769, %v753, 1.0
    %v786 = vrcp.pop %v770
    %v787 = vrcp.pop %v771
    %v788 = vrcp.pop %v772
    %v789 = vrcp.pop %v773
    %v790 = vrcp.pop %v774
    %v791 = vrcp.pop %v775
    %v792 = vrcp.pop %v776
    %v793 = vrcp.pop %v777
    %v794 = vrcp.pop %v778
    %v795 = vrcp.pop %v779
    %v796 = vrcp.pop %v780
    %v797 = vrcp.pop %v781
    %v798 = vrcp.pop %v782
    %v799 = vrcp.pop %v783
    %v800 = vrcp.pop %v784
    %v801 = vrcp.pop %v785
    %v802 = vmul.f32 %v770, %v786
    %v803 = vmul.f32 %v771, %v787
    %v804 = vmul.f32 %v772, %v788
    %v805 = vmul.f32 %v773, %v789
    %v806 = vmul.f32 %v774, %v790
    %v807 = vmul.f32 %v775, %v791
    %v808 = vmul.f32 %v776, %v792
    %v809 = vmul.f32 %v777, %v793
    %v810 = vmul.f32 %v778, %v794
    %v811 = vmul.f32 %v779, %v795
    %v812 = vmul.f32 %v780, %v796
    %v813 = vmul.f32 %v781, %v797
    %v814 = vmul.f32 %v782, %v798
    %v815 = vmul.f32 %v783, %v799
    %v816 = vmul.f32 %v784, %v800
    %v817 = vmul.f32 %v785, %v801
    %v818 = vsub.f32 2.0, %v802
    %v819 = vsub.f32 2.0, %v803
    %v820 = vsub.f32 2.0, %v804
    %v821 = vsub.f32 2.0, %v805
    %v822 = vsub.f32 2.0, %v806
    %v823 = vsub.f32 2.0, %v807
    %v824 = vsub.f32 2.0, %v808
    %v825 = vsub.f32 2.0, %v809
    %v826 = vsub.f32 2.0, %v810
    %v827 = vsub.f32 2.0, %v811
    %v828 = vsub.f32 2.0, %v812
    %v829 = vsub.f32 2.0, %v813
    %v830 = vsub.f32 2.0, %v814
    %v831 = vsub.f32 2.0, %v815
    %v832 = vsub.f32 2.0, %v816
    %v833 = vsub.f32 2.0, %v817
    %v834 = vmul.f32 %v786, %v818
    %v835 = vmul.f32 %v787, %v819
    %v836 = vmul.f32 %v788, %v820
    %v837 = vmul.f32 %v789, %v821
    %v838 = vmul.f32 %v790, %v822
    %v839 = vmul.f32 %v791, %v823
    %v840 = vmul.f32 %v792, %v824
    %v841 = vmul.f32 %v793, %v825
    %v842 = vmul.f32 %v794, %v826
    %v843 = vmul.f32 %v795, %v827
    %v844 = vmul.f32 %v796, %v828
    %v845 = vmul.f32 %v797, %v829
    %v846 = vmul.f32 %v798, %v830
    %v847 = vmul.f32 %v799, %v831
    %v848 = vmul.f32 %v800, %v832
    %v849 = vmul.f32 %v801, %v833
    %v850 = vmul.f32 %v706, %v834
    %v851 = vmul.f32 %v707, %v835
    %v852 = vmul.f32 %v708, %v836
    %v853 = vmul.f32 %v709, %v837
    %v854 = vmul.f32 %v710, %v838
    %v855 = vmul.f32 %v711, %v839
    %v856 = vmul.f32 %v712, %v840
    %v857 = vmul.f32 %v713, %v841
    %v858 = vmul.f32 %v714, %v842
    %v859 = vmul.f32 %v715, %v843
    %v860 = vmul.f32 %v716, %v844
    %v861 = vmul.f32 %v717, %v845
    %v862 = vmul.f32 %v718, %v846
    %v863 = vmul.f32 %v719, %v847
    %v864 = vmul.f32 %v720, %v848
    %v865 = vmul.f32 %v721, %v849
    %v866 = vsel %vm754, 1, 0
    %v867 = vsel %vm755, 1, 0
    %v868 = vsel %vm756, 1, 0
    %v869 = vsel %vm757, 1, 0
    %v870 = vsel %vm758, 1, 0
    %v871 = vsel %vm759, 1, 0
    %v872 = vsel %vm760, 1, 0
    %v873 = vsel %vm761, 1, 0
    %v874 = vsel %vm762, 1, 0
    %v875 = vsel %vm763, 1, 0
    %v876 = vsel %vm764, 1, 0
    %v877 = vsel %vm765, 1, 0
    %v878 = vsel %vm766, 1, 0
    %v879 = vsel %vm767, 1, 0
    %v880 = vsel %vm768, 1, 0
    %v881 = vsel %vm769, 1, 0
    %vm882 = vcmp.eq.s32.totalorder %v866, 1
    %vm883 = vcmp.eq.s32.totalorder %v867, 1
    %vm884 = vcmp.eq.s32.totalorder %v868, 1
    %vm885 = vcmp.eq.s32.totalorder %v869, 1
    %vm886 = vcmp.eq.s32.totalorder %v870, 1
    %vm887 = vcmp.eq.s32.totalorder %v871, 1
    %vm888 = vcmp.eq.s32.totalorder %v872, 1
    %vm889 = vcmp.eq.s32.totalorder %v873, 1
    %vm890 = vcmp.eq.s32.totalorder %v874, 1
    %vm891 = vcmp.eq.s32.totalorder %v875, 1
    %vm892 = vcmp.eq.s32.totalorder %v876, 1
    %vm893 = vcmp.eq.s32.totalorder %v877, 1
    %vm894 = vcmp.eq.s32.totalorder %v878, 1
    %vm895 = vcmp.eq.s32.totalorder %v879, 1
    %vm896 = vcmp.eq.s32.totalorder %v880, 1
    %vm897 = vcmp.eq.s32.totalorder %v881, 1
    %v898 = vsel %vm882, %v850, 0.0
    %v899 = vsel %vm883, %v851, 0.0
    %v900 = vsel %vm884, %v852, 0.0
    %v901 = vsel %vm885, %v853, 0.0
    %v902 = vsel %vm886, %v854, 0.0
    %v903 = vsel %vm887, %v855, 0.0
    %v904 = vsel %vm888, %v856, 0.0
    %v905 = vsel %vm889, %v857, 0.0
    %v906 = vsel %vm890, %v858, 0.0
    %v907 = vsel %vm891, %v859, 0.0
    %v908 = vsel %vm892, %v860, 0.0
    %v909 = vsel %vm893, %v861, 0.0
    %v910 = vsel %vm894, %v862, 0.0
    %v911 = vsel %vm895, %v863, 0.0
    %v912 = vsel %vm896, %v864, 0.0
    %v913 = vsel %vm897, %v865, 0.0
    %v914 = vadd.f32 %v898, %v899
    %v915 = vadd.f32 %v914, %v900
    %v916 = vadd.f32 %v915, %v901
    %v917 = vadd.f32 %v916, %v902
    %v918 = vadd.f32 %v917, %v903
    %v919 = vadd.f32 %v918, %v904
    %v920 = vadd.f32 %v919, %v905
    %v921 = vadd.f32 %v920, %v906
    %v922 = vadd.f32 %v921, %v907
    %v923 = vadd.f32 %v922, %v908
    %v924 = vadd.f32 %v923, %v909
    %v925 = vadd.f32 %v924, %v910
    %v926 = vadd.f32 %v925, %v911
    %v927 = vadd.f32 %v926, %v912
    %v928 = vadd.f32 %v927, %v913
    %v929 = vrot.slane %v928, 4
    %v930 = vadd.f32 %v928, %v929
    %v931 = vrot.slane %v930, 2
    %v932 = vadd.f32 %v930, %v931
    %v933 = vrot.slane %v932, 1
    %v934 = vadd.f32 %v932, %v933
    %v935 = vlaneseq
    %v936 = vshrl.u32 %v935, 7
    %938 = vset.pattern.permute.xlu0 %v936
    %939 = vperm.xlu0 %938, %v934
    %v940 = vpop.permute.xlu0 %939
    %v941 = vlaneseq
    %v942 = vshrl.u32 %v941, 7
    %v943 = vadd.s32 %v942, 8
    %944 = vset.pattern.permute.xlu0 %v943
    %945 = vperm.xlu0 %944, %v934
    %v946 = vpop.permute.xlu0 %945
    %v947 = vlaneseq
    %v948 = vshrl.u32 %v947, 7
    %v949 = vadd.s32 %v948, 16
    %950 = vset.pattern.permute.xlu0 %v949
    %951 = vperm.xlu0 %950, %v934
    %v952 = vpop.permute.xlu0 %951
    %v953 = vlaneseq
    %v954 = vshrl.u32 %v953, 7
    %v955 = vadd.s32 %v954, 24
    %956 = vset.pattern.permute.xlu0 %v955
    %957 = vperm.xlu0 %956, %v934
    %v958 = vpop.permute.xlu0 %957
    %v959 = vlaneseq
    %v960 = vshrl.u32 %v959, 7
    %v961 = vadd.s32 %v960, 32
    %962 = vset.pattern.permute.xlu0 %v961
    %963 = vperm.xlu0 %962, %v934
    %v964 = vpop.permute.xlu0 %963
    %v965 = vlaneseq
    %v966 = vshrl.u32 %v965, 7
    %v967 = vadd.s32 %v966, 40
    %968 = vset.pattern.permute.xlu0 %v967
    %969 = vperm.xlu0 %968, %v934
    %v970 = vpop.permute.xlu0 %969
    %v971 = vlaneseq
    %v972 = vshrl.u32 %v971, 7
    %v973 = vadd.s32 %v972, 48
    %974 = vset.pattern.permute.xlu0 %v973
    %975 = vperm.xlu0 %974, %v934
    %v976 = vpop.permute.xlu0 %975
    %v977 = vlaneseq
    %v978 = vshrl.u32 %v977, 7
    %v979 = vadd.s32 %v978, 56
    %980 = vset.pattern.permute.xlu0 %v979
    %981 = vperm.xlu0 %980, %v934
    %v982 = vpop.permute.xlu0 %981
    %v983 = vlaneseq
    %v984 = vshrl.u32 %v983, 7
    %v985 = vadd.s32 %v984, 64
    %986 = vset.pattern.permute.xlu0 %v985
    %987 = vperm.xlu0 %986, %v934
    %v988 = vpop.permute.xlu0 %987
    %v989 = vlaneseq
    %v990 = vshrl.u32 %v989, 7
    %v991 = vadd.s32 %v990, 72
    %992 = vset.pattern.permute.xlu0 %v991
    %993 = vperm.xlu0 %992, %v934
    %v994 = vpop.permute.xlu0 %993
    %v995 = vlaneseq
    %v996 = vshrl.u32 %v995, 7
    %v997 = vadd.s32 %v996, 80
    %998 = vset.pattern.permute.xlu0 %v997
    %999 = vperm.xlu0 %998, %v934
    %v1000 = vpop.permute.xlu0 %999
    %v1001 = vlaneseq
    %v1002 = vshrl.u32 %v1001, 7
    %v1003 = vadd.s32 %v1002, 88
    %1004 = vset.pattern.permute.xlu0 %v1003
    %1005 = vperm.xlu0 %1004, %v934
    %v1006 = vpop.permute.xlu0 %1005
    %v1007 = vlaneseq
    %v1008 = vshrl.u32 %v1007, 7
    %v1009 = vadd.s32 %v1008, 96
    %1010 = vset.pattern.permute.xlu0 %v1009
    %1011 = vperm.xlu0 %1010, %v934
    %v1012 = vpop.permute.xlu0 %1011
    %v1013 = vlaneseq
    %v1014 = vshrl.u32 %v1013, 7
    %v1015 = vadd.s32 %v1014, 104
    %1016 = vset.pattern.permute.xlu0 %v1015
    %1017 = vperm.xlu0 %1016, %v934
    %v1018 = vpop.permute.xlu0 %1017
    %v1019 = vlaneseq
    %v1020 = vshrl.u32 %v1019, 7
    %v1021 = vadd.s32 %v1020, 112
    %1022 = vset.pattern.permute.xlu0 %v1021
    %1023 = vperm.xlu0 %1022, %v934
    %v1024 = vpop.permute.xlu0 %1023
    %v1025 = vlaneseq
    %v1026 = vshrl.u32 %v1025, 7
    %v1027 = vadd.s32 %v1026, 120
    %1028 = vset.pattern.permute.xlu0 %v1027
    %1029 = vperm.xlu0 %1028, %v934
    %v1030 = vpop.permute.xlu0 %1029
    %v1031 = vmul.f32 %v940, %v144
    %v1032 = vmul.f32 %v946, %v147
    %v1033 = vmul.f32 %v952, %v150
    %v1034 = vmul.f32 %v958, %v153
    %v1035 = vmul.f32 %v964, %v156
    %v1036 = vmul.f32 %v970, %v159
    %v1037 = vmul.f32 %v976, %v162
    %v1038 = vmul.f32 %v982, %v165
    %v1039 = vmul.f32 %v988, %v168
    %v1040 = vmul.f32 %v994, %v171
    %v1041 = vmul.f32 %v1000, %v174
    %v1042 = vmul.f32 %v1006, %v177
    %v1043 = vmul.f32 %v1012, %v180
    %v1044 = vmul.f32 %v1018, %v183
    %v1045 = vmul.f32 %v1024, %v186
    %v1046 = vmul.f32 %v1030, %v189
    %1063 = vrot.lane.b32.xlu0 %v1031, 96
    %v1064 = vpop.permute.xlu0 %1063
    %1065 = vrot.lane.b32.xlu0 %v1032, 96
    %v1066 = vpop.permute.xlu0 %1065
    %1067 = vrot.lane.b32.xlu0 %v1033, 96
    %v1068 = vpop.permute.xlu0 %1067
    %1069 = vrot.lane.b32.xlu0 %v1034, 96
    %v1070 = vpop.permute.xlu0 %1069
    %1071 = vrot.lane.b32.xlu0 %v1035, 96
    %v1072 = vpop.permute.xlu0 %1071
    %1073 = vrot.lane.b32.xlu0 %v1036, 96
    %v1074 = vpop.permute.xlu0 %1073
    %1075 = vrot.lane.b32.xlu0 %v1037, 96
    %v1076 = vpop.permute.xlu0 %1075
    %1077 = vrot.lane.b32.xlu0 %v1038, 96
    %v1078 = vpop.permute.xlu0 %1077
    %1079 = vrot.lane.b32.xlu0 %v1039, 96
    %v1080 = vpop.permute.xlu0 %1079
    %1081 = vrot.lane.b32.xlu0 %v1040, 96
    %v1082 = vpop.permute.xlu0 %1081
    %1083 = vrot.lane.b32.xlu0 %v1041, 96
    %v1084 = vpop.permute.xlu0 %1083
    %1085 = vrot.lane.b32.xlu0 %v1042, 96
    %v1086 = vpop.permute.xlu0 %1085
    %1087 = vrot.lane.b32.xlu0 %v1043, 96
    %v1088 = vpop.permute.xlu0 %1087
    %1089 = vrot.lane.b32.xlu0 %v1044, 96
    %v1090 = vpop.permute.xlu0 %1089
    %1091 = vrot.lane.b32.xlu0 %v1045, 96
    %v1092 = vpop.permute.xlu0 %1091
    %1093 = vrot.lane.b32.xlu0 %v1046, 96
    %v1094 = vpop.permute.xlu0 %1093
    %v1111 = vadd.f32 %v144, %v1064
    %v1112 = vadd.f32 %v147, %v1066
    %v1113 = vadd.f32 %v150, %v1068
    %v1114 = vadd.f32 %v153, %v1070
    %v1115 = vadd.f32 %v156, %v1072
    %v1116 = vadd.f32 %v159, %v1074
    %v1117 = vadd.f32 %v162, %v1076
    %v1118 = vadd.f32 %v165, %v1078
    %v1119 = vadd.f32 %v168, %v1080
    %v1120 = vadd.f32 %v171, %v1082
    %v1121 = vadd.f32 %v174, %v1084
    %v1122 = vadd.f32 %v177, %v1086
    %v1123 = vadd.f32 %v180, %v1088
    %v1124 = vadd.f32 %v183, %v1090
    %v1125 = vadd.f32 %v186, %v1092
    %v1126 = vadd.f32 %v189, %v1094
    %v1127 = vld [vmem:[%s4] sm:$0xff]
    %v1128 = vld [vmem:[%s4 + $0x8] sm:$0xff]
    %1145 = vrot.lane.b32.xlu0 %v1111, 64
    %v1146 = vpop.permute.xlu0 %1145
    %1147 = vrot.lane.b32.xlu0 %v1112, 64
    %v1148 = vpop.permute.xlu0 %1147
    %1149 = vrot.lane.b32.xlu0 %v1113, 64
    %v1150 = vpop.permute.xlu0 %1149
    %1151 = vrot.lane.b32.xlu0 %v1114, 64
    %v1152 = vpop.permute.xlu0 %1151
    %1153 = vrot.lane.b32.xlu0 %v1115, 64
    %v1154 = vpop.permute.xlu0 %1153
    %1155 = vrot.lane.b32.xlu0 %v1116, 64
    %v1156 = vpop.permute.xlu0 %1155
    %1157 = vrot.lane.b32.xlu0 %v1117, 64
    %v1158 = vpop.permute.xlu0 %1157
    %1159 = vrot.lane.b32.xlu0 %v1118, 64
    %v1160 = vpop.permute.xlu0 %1159
    %1161 = vrot.lane.b32.xlu0 %v1119, 64
    %v1162 = vpop.permute.xlu0 %1161
    %1163 = vrot.lane.b32.xlu0 %v1120, 64
    %v1164 = vpop.permute.xlu0 %1163
    %1165 = vrot.lane.b32.xlu0 %v1121, 64
    %v1166 = vpop.permute.xlu0 %1165
    %1167 = vrot.lane.b32.xlu0 %v1122, 64
    %v1168 = vpop.permute.xlu0 %1167
    %1169 = vrot.lane.b32.xlu0 %v1123, 64
    %v1170 = vpop.permute.xlu0 %1169
    %1171 = vrot.lane.b32.xlu0 %v1124, 64
    %v1172 = vpop.permute.xlu0 %1171
    %1173 = vrot.lane.b32.xlu0 %v1125, 64
    %v1174 = vpop.permute.xlu0 %1173
    %1175 = vrot.lane.b32.xlu0 %v1126, 64
    %v1176 = vpop.permute.xlu0 %1175
    %1193 = vmatpush.msra.mxu0 %v1176
    %1194 = vmatpush.msra.mxu0 %v1174
    %1195 = vmatpush.msra.mxu0 %v1172
    %1196 = vmatpush.msra.mxu0 %v1170
    %1197 = vmatpush.msra.mxu0 %v1168
    %1198 = vmatpush.msra.mxu0 %v1166
    %1199 = vmatpush.msra.mxu0 %v1164
    %1200 = vmatpush.msra.mxu0 %v1162
    %1201 = vmatpush.msra.mxu0 %v1160
    %1202 = vmatpush.msra.mxu0 %v1158
    %1203 = vmatpush.msra.mxu0 %v1156
    %1204 = vmatpush.msra.mxu0 %v1154
    %1205 = vmatpush.msra.mxu0 %v1152
    %1206 = vmatpush.msra.mxu0 %v1150
    %1207 = vmatpush.msra.mxu0 %v1148
    %1208 = vmatpush.msra.mxu0 %v1146
    %1209 = vmatmul.f32.gmra.mxu0 %v1127
    %v1210 = vpop.f32.mrf.mxu0
    %v1211 = vadd.f32 0.0, %v1210
    %1212 = vmatmul.f32.gmra.mxu0 %v1128
    %v1213 = vpop.f32.mrf.mxu0
    %v1214 = vadd.f32 0.0, %v1213
    %1215 = vdwg.mxu0
    %v1217 = vrot.slane %v1211, 4
    %1218 = vrot.lane.b32.xlu0 %v1217, 32
    %v1219 = vpop.permute.xlu0 %1218
    %1222 = vrot.lane.b32.xlu0 %v1214, 64
    %v1223 = vpop.permute.xlu0 %1222
    %v1225 = vrot.slane %v1214, 4
    %1226 = vrot.lane.b32.xlu0 %v1225, 96
    %v1227 = vpop.permute.xlu0 %1226
    %v1229 = vsel %vm432, %v1211, %v1219
    %vm1230 = vcmask 523264
    %v1231 = vsel %vm1230, %v1229, %v1223
    %vm1232 = vcmask 785408
    %v1233 = vsel %vm1232, %v1231, %v1227
    %1234 = vst [vmem:[#allocation7] sm:$0xf] %v1233
    // Predicated region
    $region30: #{tpu_custom_call.1} parent=1 // pred_check
      _
    $region31: #{tpu_custom_call.1} parent=1 // pred_check_branch
      %1236 = sbr.rel (0) target = $region33
    $region32: #{tpu_custom_call.1} parent=1 // pred_region
      %1238 = vsyncadd [#allocation4], 0
      %s1240 = sshll.u32 [#allocation7], 4
      %s1241 = int_to_ptr.vmem [resolvable:$true] %s1240
      %s1242 = sshll.u32 %s5, 4
      %s1243 = int_to_ptr.hbm [resolvable:$true] %s1242
      %1245 = dma.vmem_to_hbm [thread:$0]  %s1241, 64, %s1243, [#allocation4]
    $region33: #{tpu_custom_call.1} parent=1 // pred_fallthru
      _
    // Predicated region
    $region34: #{tpu_custom_call.1} parent=1 // pred_check
      _
    $region35: #{tpu_custom_call.1} parent=1 // pred_check_branch
      %1247 = sbr.rel (0) target = $region37
    $region36: #{tpu_custom_call.1} parent=1 // pred_region
      %1249 = dma.done [#allocation4], 64
    $region37: #{tpu_custom_call.1} parent=1 // pred_fallthru
      _
    %1250 = vsyncpa [#allocation3], 1
    %1251 = vsyncpa [#allocation6], 1
    %1252 = vsyncpa [#allocation4], 1

</llo_original>
